<compile_context>
chip_gen: v6e
topology: v6e:2x2x1
jax: 0.10.0
libtpu: 0.0.40
codegen_flags: <defaults>
</compile_context>

<pallas_src>
import jax
import jax.numpy as jnp
from jax.experimental import pallas as pl
from jax.experimental.pallas import tpu as pltpu


def _cdiv(a, b):
    return -(-a // b)


def _round_up(x, m):
    return ((x + m - 1) // m) * m


# --------------------------------------------------------------------------- #
# Kernel
# --------------------------------------------------------------------------- #
def critic_kernel(sa_ref,
                  w1_ref, b1_ref,
                  w2_ref, b2_ref,
                  w5_ref, b5_ref,
                  w3_ref, w6_ref, b36_ref,
                  out_ref):
    cd = w1_ref.dtype                     # matmul input dtype (bf16 default)
    H = w2_ref.shape[0]                   # hidden width (256)

    sa = sa_ref[...]                      # (TB, Ds+Da), already in compute dtype

    # Fused twin layer 1: one (TB, Dsa) @ (Dsa, 512) matmul == [l1 | l4].
    hg = jnp.dot(sa, w1_ref[...], preferred_element_type=jnp.float32) + b1_ref[...]
    hg = jnp.maximum(hg, 0.0)             # f32 ReLU (v5e has no bf16 VPU)

    # Split the two branches at a lane-aligned (256 = 2*128) boundary;
    # cast to bf16 only right before the next MXU dot.
    h = hg[:, :H].astype(cd)
    g = hg[:, H:].astype(cd)

    # Layer 2 / layer 5 (dominant 256x256 matmuls), f32 accumulation + f32 ReLU.
    h2 = jnp.maximum(
        jnp.dot(h, w2_ref[...], preferred_element_type=jnp.float32) + b2_ref[...], 0.0)
    g2 = jnp.maximum(
        jnp.dot(g, w5_ref[...], preferred_element_type=jnp.float32) + b5_ref[...], 0.0)

    # Output heads on the VPU/XLU instead of the MXU: an N=2, K=512 matmul would
    # cost a full MXU pass for ~0.4% of the kernel FLOPs.  w3/w6 are kept in f32.
    q1 = jnp.sum(h2 * w3_ref[...], axis=-1, keepdims=True)     # (TB, 1)
    q2 = jnp.sum(g2 * w6_ref[...], axis=-1, keepdims=True)     # (TB, 1)
    q = jnp.concatenate([q1, q2], axis=-1) + b36_ref[...]      # (TB, 2)
    out_ref[...] = q.astype(out_ref.dtype)


# --------------------------------------------------------------------------- #
# Parameter packing (PyTorch layout -> fused kernel layout)
# --------------------------------------------------------------------------- #
def pack_critic_params(raw, compute_dtype=jnp.bfloat16):
    """raw[l{i}] = {'w': (out,in) like nn.Linear.weight, 'b': (out,)}."""
    cd = compute_dtype
    # Fused twin layer-1 weight: [l1 | l4] -> (Dsa, 512).
    w1 = jnp.concatenate([raw["l1"]["w"].T, raw["l4"]["w"].T], axis=1)
    b1 = jnp.concatenate([raw["l1"]["b"], raw["l4"]["b"]])[None, :]     # (1, 512)

    w2 = raw["l2"]["w"].T                                               # (256, 256)
    w5 = raw["l5"]["w"].T
    b2 = raw["l2"]["b"][None, :]
    b5 = raw["l5"]["b"][None, :]

    # Head weights stay as f32 row vectors (used on the VPU, tiny).
    w3 = raw["l3"]["w"]                                                 # (1, 256)
    w6 = raw["l6"]["w"]                                                 # (1, 256)
    b36 = jnp.concatenate([raw["l3"]["b"], raw["l6"]["b"]])[None, :]    # (1, 2)

    return {
        "w1": w1.astype(cd), "b1": b1.astype(jnp.float32),
        "w2": w2.astype(cd), "b2": b2.astype(jnp.float32),
        "w5": w5.astype(cd), "b5": b5.astype(jnp.float32),
        "w3": w3.astype(jnp.float32), "w6": w6.astype(jnp.float32),
        "b36": b36.astype(jnp.float32),
    }


# --------------------------------------------------------------------------- #
# Wrapper (== Critic.forward): returns (q1, q2)
# --------------------------------------------------------------------------- #
def critic_forward(state, action, packed, *, max_block_rows=1024, min_grid_steps=2):
    B = state.shape[0]
    cd = packed["w1"].dtype

    # Concat once in the wrapper (tiny copy) -> single lane-denser input stream.
    sa = jnp.concatenate([state, action], axis=1).astype(cd)
    Dsa = sa.shape[1]

    # Auto-select the batch tile: cap per-tile rows, force >= min_grid_steps
    # steps (v7x 2-TC sharding), keep the tile a multiple of 8 and padding small.
    steps = max(min_grid_steps, _cdiv(B, max_block_rows))
    TB = _round_up(_cdiv(B, steps), 8)
    Bp = _round_up(B, TB)
    if Bp != B:
        sa = jnp.pad(sa, ((0, Bp - B), (0, 0)))

    def rows(cols):
        return pl.BlockSpec((TB, cols), lambda i: (i, 0))

    def pinned(x):                    # full array, constant index -> VMEM-resident
        return pl.BlockSpec(x.shape, lambda i: (0, 0))

    out = pl.pallas_call(
        critic_kernel,
        out_shape=jax.ShapeDtypeStruct((Bp, 2), jnp.float32),
        grid=(Bp // TB,),
        in_specs=[rows(Dsa),
                  pinned(packed["w1"]), pinned(packed["b1"]),
                  pinned(packed["w2"]), pinned(packed["b2"]),
                  pinned(packed["w5"]), pinned(packed["b5"]),
                  pinned(packed["w3"]), pinned(packed["w6"]),
                  pinned(packed["b36"])],
        out_specs=rows(2),
        compiler_params=pltpu.CompilerParams(dimension_semantics=("parallel",)),
    )(sa,
      packed["w1"], packed["b1"],
      packed["w2"], packed["b2"],
      packed["w5"], packed["b5"],
      packed["w3"], packed["w6"], packed["b36"])

    q = out[:B]
    return q[:, 0:1], q[:, 1:2]


# --------------------------------------------------------------------------- #
# Init + pure-JAX reference
# --------------------------------------------------------------------------- #
def init_raw_params(key, state_dim, action_dim, num_agent):
    """PyTorch-like nn.Linear init: weight (out,in), bias (out,), U(-1/sqrt(fan_in), .)."""
    in_dim = (state_dim + action_dim) * num_agent
    dims = {"l1": (in_dim, 256), "l2": (256, 256), "l3": (256, 1),
            "l4": (in_dim, 256), "l5": (256, 256), "l6": (256, 1)}
    raw = {}
    for name, (fan_in, fan_out) in dims.items():
        key, kw, kb = jax.random.split(key, 3)
        bound = 1.0 / float(fan_in) ** 0.5
        raw[name] = {
            "w": jax.random.uniform(kw, (fan_out, fan_in), jnp.float32, -bound, bound),
            "b": jax.random.uniform(kb, (fan_out,), jnp.float32, -bound, bound),
        }
    return raw


def critic_reference(state, action, raw, compute_dtype=jnp.float32):
    """Mirrors Critic.forward (and the kernel's dtype handling for bf16 mode)."""
    cd = compute_dtype
    sa = jnp.concatenate([state, action], axis=1).astype(cd)

    def lin(x, layer):
        return (jnp.dot(x.astype(cd), raw[layer]["w"].T.astype(cd),
                        preferred_element_type=jnp.float32)
                + raw[layer]["b"][None, :])

    h = jnp.maximum(lin(sa, "l1"), 0.0)
    h = jnp.maximum(lin(h, "l2"), 0.0)
    q1 = jnp.dot(h, raw["l3"]["w"].T) + raw["l3"]["b"][None, :]      # head in f32
    g = jnp.maximum(lin(sa, "l4"), 0.0)
    g = jnp.maximum(lin(g, "l5"), 0.0)
    q2 = jnp.dot(g, raw["l6"]["w"].T) + raw["l6"]["b"][None, :]
    return q1, q2


# --------------------------------------------------------------------------- #
if __name__ == "__main__":
    batch, state_dim, action_dim, num_agent = 4, 8, 4, 2
    Ds = state_dim * num_agent   # 16
    Da = action_dim * num_agent  # 8

    key = jax.random.PRNGKey(0)
    key, ks, ka, kp = jax.random.split(key, 4)
    state = jax.random.normal(ks, (batch, Ds), jnp.float32)
    action = jax.random.normal(ka, (batch, Da), jnp.float32)
    raw = init_raw_params(kp, state_dim, action_dim, num_agent)

    # --- bf16 default path (f32 accumulation) ------------------------------
    packed_bf16 = pack_critic_params(raw)                      # bf16 by default
    q1b, q2b = critic_forward(state, action, packed_bf16)
    jax.block_until_ready((q1b, q2b))
    r1b, r2b = critic_reference(state, action, raw, jnp.bfloat16)
    assert q1b.shape == (batch, 1) and q2b.shape == (batch, 1)
    assert jnp.allclose(q1b, r1b, atol=5e-3, rtol=5e-3)
    assert jnp.allclose(q2b, r2b, atol=5e-3, rtol=5e-3)

    # --- f32 path: exact module semantics ----------------------------------
    packed_f32 = pack_critic_params(raw, jnp.float32)
    q1, q2 = critic_forward(state, action, packed_f32)
    jax.block_until_ready((q1, q2))
    r1, r2 = critic_reference(state, action, raw, jnp.float32)
    assert jnp.allclose(q1, r1, atol=1e-5, rtol=1e-5)
    assert jnp.allclose(q2, r2, atol=1e-5, rtol=1e-5)

    # --- larger, non-multiple batch: exercises auto-TB, padding, 2-step grid --
    kb1, kb2 = jax.random.split(key)
    state_l = jax.random.normal(kb1, (300, Ds), jnp.float32)
    action_l = jax.random.normal(kb2, (300, Da), jnp.float32)
    q1l, q2l = critic_forward(state_l, action_l, packed_f32)
    jax.block_until_ready((q1l, q2l))
    r1l, r2l = critic_reference(state_l, action_l, raw, jnp.float32)
    assert jnp.allclose(q1l, r1l, atol=1e-4, rtol=1e-4)
    assert jnp.allclose(q2l, r2l, atol=1e-4, rtol=1e-4)

    q1lb, q2lb = critic_forward(state_l, action_l, packed_bf16)
    jax.block_until_ready((q1lb, q2lb))
    r1lb, r2lb = critic_reference(state_l, action_l, raw, jnp.bfloat16)
    assert jnp.allclose(q1lb, r1lb, atol=5e-3, rtol=5e-3)
    assert jnp.allclose(q2lb, r2lb, atol=5e-3, rtol=5e-3)

    print("KERNEL_OK")
</pallas_src>

<mosaic_0001>
module attributes {stable_mosaic.version = 11 : i64} {
  func.func @critic_kernel(%arg0: i32, %arg1: memref<8x24xbf16, #tpu.memory_space<vmem>>, %arg2: memref<24x512xbf16, #tpu.memory_space<vmem>>, %arg3: memref<1x512xf32, #tpu.memory_space<vmem>>, %arg4: memref<256x256xbf16, #tpu.memory_space<vmem>>, %arg5: memref<1x256xf32, #tpu.memory_space<vmem>>, %arg6: memref<256x256xbf16, #tpu.memory_space<vmem>>, %arg7: memref<1x256xf32, #tpu.memory_space<vmem>>, %arg8: memref<1x256xf32, #tpu.memory_space<vmem>>, %arg9: memref<1x256xf32, #tpu.memory_space<vmem>>, %arg10: memref<1x2xf32, #tpu.memory_space<vmem>>, %arg11: memref<8x2xf32, #tpu.memory_space<vmem>>) attributes {dimension_semantics = [#tpu.dimension_semantics<parallel>], iteration_bounds = array<i64: 1>, scalar_prefetch = 0 : i64, scratch_operands = 0 : i64, tpu.core_type = #tpu.core_type<tc>, window_params = [{transform_indices = @transform_0, window_bounds = array<i64: 8, 24>}, {pipeline_mode = #tpu.pipeline_mode<synchronous>, transform_indices = @transform_1, window_bounds = array<i64: 24, 512>}, {pipeline_mode = #tpu.pipeline_mode<synchronous>, transform_indices = @transform_2, window_bounds = array<i64: 1, 512>}, {pipeline_mode = #tpu.pipeline_mode<synchronous>, transform_indices = @transform_3, window_bounds = array<i64: 256, 256>}, {pipeline_mode = #tpu.pipeline_mode<synchronous>, transform_indices = @transform_4, window_bounds = array<i64: 1, 256>}, {pipeline_mode = #tpu.pipeline_mode<synchronous>, transform_indices = @transform_5, window_bounds = array<i64: 256, 256>}, {pipeline_mode = #tpu.pipeline_mode<synchronous>, transform_indices = @transform_6, window_bounds = array<i64: 1, 256>}, {pipeline_mode = #tpu.pipeline_mode<synchronous>, transform_indices = @transform_7, window_bounds = array<i64: 1, 256>}, {pipeline_mode = #tpu.pipeline_mode<synchronous>, transform_indices = @transform_8, window_bounds = array<i64: 1, 256>}, {pipeline_mode = #tpu.pipeline_mode<synchronous>, transform_indices = @transform_9, window_bounds = array<i64: 1, 2>}, {transform_indices = @transform_10, window_bounds = array<i64: 8, 2>}]} {
    %c0 = arith.constant 0 : index
    %c0_0 = arith.constant 0 : index
    %0 = vector.load %arg1[%c0, %c0_0] : memref<8x24xbf16, #tpu.memory_space<vmem>>, vector<8x24xbf16>
    %c0_1 = arith.constant 0 : index
    %c0_2 = arith.constant 0 : index
    %1 = vector.load %arg2[%c0_1, %c0_2] : memref<24x512xbf16, #tpu.memory_space<vmem>>, vector<24x512xbf16>
    %cst = arith.constant dense<0.000000e+00> : vector<8x512xf32>
    %2 = tpu.matmul %0, %1, %cst {dimension_numbers = #tpu.dot_dimension_numbers<[1], [0], [0], [1], [0, 0, 1, 1], [], []>} : vector<8x24xbf16>, vector<24x512xbf16>, vector<8x512xf32> -> vector<8x512xf32>
    %c0_3 = arith.constant 0 : index
    %c0_4 = arith.constant 0 : index
    %3 = vector.load %arg3[%c0_3, %c0_4] : memref<1x512xf32, #tpu.memory_space<vmem>>, vector<1x512xf32>
    %4 = vector.broadcast %3 : vector<1x512xf32> to vector<8x512xf32>
    %5 = arith.addf %2, %4 : vector<8x512xf32>
    %cst_5 = arith.constant 0.000000e+00 : f32
    %6 = vector.broadcast %cst_5 : f32 to vector<8x512xf32>
    %7 = arith.maximumf %5, %6 : vector<8x512xf32>
    %8 = vector.extract_strided_slice %7 {offsets = [0, 0], sizes = [8, 256], strides = [1, 1]} : vector<8x512xf32> to vector<8x256xf32>
    %9 = arith.truncf %8 : vector<8x256xf32> to vector<8x256xbf16>
    %10 = vector.extract_strided_slice %7 {offsets = [0, 256], sizes = [8, 256], strides = [1, 1]} : vector<8x512xf32> to vector<8x256xf32>
    %11 = arith.truncf %10 : vector<8x256xf32> to vector<8x256xbf16>
    %c0_6 = arith.constant 0 : index
    %c0_7 = arith.constant 0 : index
    %12 = vector.load %arg4[%c0_6, %c0_7] : memref<256x256xbf16, #tpu.memory_space<vmem>>, vector<256x256xbf16>
    %cst_8 = arith.constant dense<0.000000e+00> : vector<8x256xf32>
    %13 = tpu.matmul %9, %12, %cst_8 {dimension_numbers = #tpu.dot_dimension_numbers<[1], [0], [0], [1], [0, 0, 1, 1], [], []>} : vector<8x256xbf16>, vector<256x256xbf16>, vector<8x256xf32> -> vector<8x256xf32>
    %c0_9 = arith.constant 0 : index
    %c0_10 = arith.constant 0 : index
    %14 = vector.load %arg5[%c0_9, %c0_10] : memref<1x256xf32, #tpu.memory_space<vmem>>, vector<1x256xf32>
    %15 = vector.broadcast %14 : vector<1x256xf32> to vector<8x256xf32>
    %16 = arith.addf %13, %15 : vector<8x256xf32>
    %cst_11 = arith.constant 0.000000e+00 : f32
    %17 = vector.broadcast %cst_11 : f32 to vector<8x256xf32>
    %18 = arith.maximumf %16, %17 : vector<8x256xf32>
    %c0_12 = arith.constant 0 : index
    %c0_13 = arith.constant 0 : index
    %19 = vector.load %arg6[%c0_12, %c0_13] : memref<256x256xbf16, #tpu.memory_space<vmem>>, vector<256x256xbf16>
    %cst_14 = arith.constant dense<0.000000e+00> : vector<8x256xf32>
    %20 = tpu.matmul %11, %19, %cst_14 {dimension_numbers = #tpu.dot_dimension_numbers<[1], [0], [0], [1], [0, 0, 1, 1], [], []>} : vector<8x256xbf16>, vector<256x256xbf16>, vector<8x256xf32> -> vector<8x256xf32>
    %c0_15 = arith.constant 0 : index
    %c0_16 = arith.constant 0 : index
    %21 = vector.load %arg7[%c0_15, %c0_16] : memref<1x256xf32, #tpu.memory_space<vmem>>, vector<1x256xf32>
    %22 = vector.broadcast %21 : vector<1x256xf32> to vector<8x256xf32>
    %23 = arith.addf %20, %22 : vector<8x256xf32>
    %cst_17 = arith.constant 0.000000e+00 : f32
    %24 = vector.broadcast %cst_17 : f32 to vector<8x256xf32>
    %25 = arith.maximumf %23, %24 : vector<8x256xf32>
    %c0_18 = arith.constant 0 : index
    %c0_19 = arith.constant 0 : index
    %26 = vector.load %arg8[%c0_18, %c0_19] : memref<1x256xf32, #tpu.memory_space<vmem>>, vector<1x256xf32>
    %27 = vector.broadcast %26 : vector<1x256xf32> to vector<8x256xf32>
    %28 = arith.mulf %18, %27 : vector<8x256xf32>
    %cst_20 = arith.constant dense<0.000000e+00> : vector<8xf32>
    %29 = vector.multi_reduction <add>, %28, %cst_20 [1] : vector<8x256xf32> to vector<8xf32>
    %30 = vector.shape_cast %29 : vector<8xf32> to vector<8x1xf32>
    %c0_21 = arith.constant 0 : index
    %c0_22 = arith.constant 0 : index
    %31 = vector.load %arg9[%c0_21, %c0_22] : memref<1x256xf32, #tpu.memory_space<vmem>>, vector<1x256xf32>
    %32 = vector.broadcast %31 : vector<1x256xf32> to vector<8x256xf32>
    %33 = arith.mulf %25, %32 : vector<8x256xf32>
    %cst_23 = arith.constant dense<0.000000e+00> : vector<8xf32>
    %34 = vector.multi_reduction <add>, %33, %cst_23 [1] : vector<8x256xf32> to vector<8xf32>
    %35 = vector.shape_cast %34 : vector<8xf32> to vector<8x1xf32>
    %36 = tpu.concatenate %30, %35 in 1 : vector<8x1xf32>, vector<8x1xf32> -> vector<8x2xf32>
    %c0_24 = arith.constant 0 : index
    %c0_25 = arith.constant 0 : index
    %37 = vector.load %arg10[%c0_24, %c0_25] : memref<1x2xf32, #tpu.memory_space<vmem>>, vector<1x2xf32>
    %38 = vector.broadcast %37 : vector<1x2xf32> to vector<8x2xf32>
    %39 = arith.addf %36, %38 : vector<8x2xf32>
    %c0_26 = arith.constant 0 : index
    %c0_27 = arith.constant 0 : index
    %40 = vector.load %arg11[%c0_26, %c0_27] : memref<8x2xf32, #tpu.memory_space<vmem>>, vector<8x2xf32>
    tpu.vector_store %arg11[%c0_26, %c0_27], %39 {strides = array<i32>} : memref<8x2xf32, #tpu.memory_space<vmem>>, vector<8x2xf32>,
    return
  }
  func.func @transform_0(%arg0: i32) -> (i32, i32) {
    %c0_i32 = arith.constant 0 : i32
    %c0_i32_0 = arith.constant 0 : i32
    return %arg0, %c0_i32 : i32, i32
  }
  func.func @transform_1(%arg0: i32) -> (i32, i32) {
    %c0_i32 = arith.constant 0 : i32
    %c0_i32_0 = arith.constant 0 : i32
    %c0_i32_1 = arith.constant 0 : i32
    return %c0_i32, %c0_i32_0 : i32, i32
  }
  func.func @transform_2(%arg0: i32) -> (i32, i32) {
    %c0_i32 = arith.constant 0 : i32
    %c0_i32_0 = arith.constant 0 : i32
    %c0_i32_1 = arith.constant 0 : i32
    return %c0_i32, %c0_i32_0 : i32, i32
  }
  func.func @transform_3(%arg0: i32) -> (i32, i32) {
    %c0_i32 = arith.constant 0 : i32
    %c0_i32_0 = arith.constant 0 : i32
    %c0_i32_1 = arith.constant 0 : i32
    return %c0_i32, %c0_i32_0 : i32, i32
  }
  func.func @transform_4(%arg0: i32) -> (i32, i32) {
    %c0_i32 = arith.constant 0 : i32
    %c0_i32_0 = arith.constant 0 : i32
    %c0_i32_1 = arith.constant 0 : i32
    return %c0_i32, %c0_i32_0 : i32, i32
  }
  func.func @transform_5(%arg0: i32) -> (i32, i32) {
    %c0_i32 = arith.constant 0 : i32
    %c0_i32_0 = arith.constant 0 : i32
    %c0_i32_1 = arith.constant 0 : i32
    return %c0_i32, %c0_i32_0 : i32, i32
  }
  func.func @transform_6(%arg0: i32) -> (i32, i32) {
    %c0_i32 = arith.constant 0 : i32
    %c0_i32_0 = arith.constant 0 : i32
    %c0_i32_1 = arith.constant 0 : i32
    return %c0_i32, %c0_i32_0 : i32, i32
  }
  func.func @transform_7(%arg0: i32) -> (i32, i32) {
    %c0_i32 = arith.constant 0 : i32
    %c0_i32_0 = arith.constant 0 : i32
    %c0_i32_1 = arith.constant 0 : i32
    return %c0_i32, %c0_i32_0 : i32, i32
  }
  func.func @transform_8(%arg0: i32) -> (i32, i32) {
    %c0_i32 = arith.constant 0 : i32
    %c0_i32_0 = arith.constant 0 : i32
    %c0_i32_1 = arith.constant 0 : i32
    return %c0_i32, %c0_i32_0 : i32, i32
  }
  func.func @transform_9(%arg0: i32) -> (i32, i32) {
    %c0_i32 = arith.constant 0 : i32
    %c0_i32_0 = arith.constant 0 : i32
    %c0_i32_1 = arith.constant 0 : i32
    return %c0_i32, %c0_i32_0 : i32, i32
  }
  func.func @transform_10(%arg0: i32) -> (i32, i32) {
    %c0_i32 = arith.constant 0 : i32
    %c0_i32_0 = arith.constant 0 : i32
    return %arg0, %c0_i32 : i32, i32
  }
}

</mosaic_0001>

<llo_original>
// kernel: tpu_custom_call.1
$region0: #{tpu_custom_call.1}
  #allocation0 [shape = 'u32[]', space=smem, size = 0x4, offset = 0x4, fixed_abs, tag = 'smem constant byte address 0x4 - core index']
  #allocation1 [shape = 'u32[144,128]{1,0:T(1,128)}', space=vmem, size = 0x12000, scoped, tag = 'internal scratch']
  %s0 = inlined_call_operand.hbm [shape: bf16[8,24], index: 0, kind: input, shape index: {}]
  %s1 = inlined_call_operand.hbm [shape: bf16[24,512], index: 1, kind: input, shape index: {}]
  %s2 = inlined_call_operand.hbm [shape: f32[1,512], index: 2, kind: input, shape index: {}]
  %s3 = inlined_call_operand.hbm [shape: bf16[256,256], index: 3, kind: input, shape index: {}]
  %s4 = inlined_call_operand.vmem [shape: f32[1,256], index: 4, kind: input, shape index: {}]
  %s5 = inlined_call_operand.hbm [shape: bf16[256,256], index: 5, kind: input, shape index: {}]
  %s6 = inlined_call_operand.vmem [shape: f32[1,256], index: 6, kind: input, shape index: {}]
  %s7 = inlined_call_operand.vmem [shape: f32[1,256], index: 7, kind: input, shape index: {}]
  %s8 = inlined_call_operand.vmem [shape: f32[1,256], index: 8, kind: input, shape index: {}]
  %s9 = inlined_call_operand.vmem [shape: f32[1,2], index: 9, kind: input, shape index: {}]
  %s10 = inlined_call_operand.vmem [shape: f32[8,2], index: 10, kind: output, shape index: {}]
  %s11 = sld [smem:[#allocation0]]
  $region70: #{tpu_custom_call.1} parent=0
    _
  %s13 = ssub.s32 1, %s11
  %s14 = scalar_select 0, %s13, %s11
  $region1: #{tpu_custom_call.1} parent=0
    #allocation2 [shape = 'u8[2048]{0}', space=vmem, size = 0x800, scoped, tag = 'input window, operand 0, single buffered']
    #allocation3 [shape = 's32[1]{0}', space=sflag, size = 0x4, scoped, tag = 'scoped memory for tpu_custom_call.1']
    #allocation4 [shape = 'u8[24576]{0}', space=vmem, size = 0x6000, scoped, tag = 'input window, operand 1, single buffered']
    #allocation5 [shape = 's32[1]{0}', space=sflag, size = 0x4, scoped, tag = 'scoped memory for tpu_custom_call.1']
    #allocation6 [shape = 'u8[2048]{0}', space=vmem, size = 0x800, scoped, tag = 'input window, operand 2, single buffered']
    #allocation7 [shape = 'u8[131072]{0}', space=vmem, size = 0x20000, scoped, tag = 'input window, operand 3, single buffered']
    #allocation8 [shape = 's32[1]{0}', space=sflag, size = 0x4, scoped, tag = 'scoped memory for tpu_custom_call.1']
    #allocation9 [shape = 'u8[131072]{0}', space=vmem, size = 0x20000, scoped, tag = 'input window, operand 5, single buffered']
    %15 = vsyncpa [#allocation3], 0
    %16 = vsyncpa [#allocation5], 0
    %17 = vsyncpa [#allocation8], 0
    // Predicated region
    $region2: #{tpu_custom_call.1} parent=1 // pred_check
      _
    $region3: #{tpu_custom_call.1} parent=1 // pred_check_branch
      %19 = sbr.rel (0) target = $region5
    $region4: #{tpu_custom_call.1} parent=1 // pred_region
      %s21 = ssub.s32 64, 64
      %22 = vsyncadd [#allocation3], %s21
      %s24 = sshll.u32 [#allocation2], 4
      %s25 = int_to_ptr.vmem [resolvable:$true] %s24
      %27 = dma.hbm_to_vmem [thread:$0]  %s0, 64, %s25, [#allocation3]
    $region5: #{tpu_custom_call.1} parent=1 // pred_fallthru
      _
    // Predicated region
    $region6: #{tpu_custom_call.1} parent=1 // pred_check
      _
    $region7: #{tpu_custom_call.1} parent=1 // pred_check_branch
      %29 = sbr.rel (0) target = $region9
    $region8: #{tpu_custom_call.1} parent=1 // pred_region
      %s31 = ssub.s32 768, 768
      %32 = vsyncadd [#allocation5], %s31
      %s33 = sshll.u32 [#allocation4], 4
      %s34 = int_to_ptr.vmem [resolvable:$true] %s33
      %39 = dma.hbm_to_vmem [thread:$0]  %s1, 768, %s34, [#allocation5], 256, 256, 16
    $region9: #{tpu_custom_call.1} parent=1 // pred_fallthru
      _
    // Predicated region
    $region10: #{tpu_custom_call.1} parent=1 // pred_check
      _
    $region11: #{tpu_custom_call.1} parent=1 // pred_check_branch
      %41 = sbr.rel (0) target = $region13
    $region12: #{tpu_custom_call.1} parent=1 // pred_region
      %s43 = ssub.s32 64, 64
      %44 = vsyncadd [#allocation5], %s43
      %s46 = sshll.u32 [#allocation6], 4
      %s47 = int_to_ptr.vmem [resolvable:$true] %s46
      %49 = dma.hbm_to_vmem [thread:$0]  %s2, 64, %s47, [#allocation5]
    $region13: #{tpu_custom_call.1} parent=1 // pred_fallthru
      _
    // Predicated region
    $region14: #{tpu_custom_call.1} parent=1 // pred_check
      _
    $region15: #{tpu_custom_call.1} parent=1 // pred_check_branch
      %51 = sbr.rel (0) target = $region17
    $region16: #{tpu_custom_call.1} parent=1 // pred_region
      %s53 = ssub.s32 4096, 4096
      %54 = vsyncadd [#allocation8], %s53
      %s55 = sshll.u32 [#allocation7], 4
      %s56 = int_to_ptr.vmem [resolvable:$true] %s55
      %61 = dma.hbm_to_vmem [thread:$0]  %s3, 4096, %s56, [#allocation8], 128, 128, 8
    $region17: #{tpu_custom_call.1} parent=1 // pred_fallthru
      _
    // Predicated region
    $region18: #{tpu_custom_call.1} parent=1 // pred_check
      _
    $region19: #{tpu_custom_call.1} parent=1 // pred_check_branch
      %63 = sbr.rel (0) target = $region21
    $region20: #{tpu_custom_call.1} parent=1 // pred_region
      _
    $region21: #{tpu_custom_call.1} parent=1 // pred_fallthru
      _
    // Predicated region
    $region22: #{tpu_custom_call.1} parent=1 // pred_check
      _
    $region23: #{tpu_custom_call.1} parent=1 // pred_check_branch
      %65 = sbr.rel (0) target = $region25
    $region24: #{tpu_custom_call.1} parent=1 // pred_region
      %s67 = ssub.s32 4096, 4096
      %68 = vsyncadd [#allocation8], %s67
      %s69 = sshll.u32 [#allocation9], 4
      %s70 = int_to_ptr.vmem [resolvable:$true] %s69
      %75 = dma.hbm_to_vmem [thread:$0]  %s5, 4096, %s70, [#allocation8], 128, 128, 8
    $region25: #{tpu_custom_call.1} parent=1 // pred_fallthru
      _
    // Predicated region
    $region26: #{tpu_custom_call.1} parent=1 // pred_check
      _
    $region27: #{tpu_custom_call.1} parent=1 // pred_check_branch
      %77 = sbr.rel (0) target = $region29
    $region28: #{tpu_custom_call.1} parent=1 // pred_region
      _
    $region29: #{tpu_custom_call.1} parent=1 // pred_fallthru
      _
    // Predicated region
    $region30: #{tpu_custom_call.1} parent=1 // pred_check
      _
    $region31: #{tpu_custom_call.1} parent=1 // pred_check_branch
      %79 = sbr.rel (0) target = $region33
    $region32: #{tpu_custom_call.1} parent=1 // pred_region
      _
    $region33: #{tpu_custom_call.1} parent=1 // pred_fallthru
      _
    // Predicated region
    $region34: #{tpu_custom_call.1} parent=1 // pred_check
      _
    $region35: #{tpu_custom_call.1} parent=1 // pred_check_branch
      %81 = sbr.rel (0) target = $region37
    $region36: #{tpu_custom_call.1} parent=1 // pred_region
      _
    $region37: #{tpu_custom_call.1} parent=1 // pred_fallthru
      _
    // Predicated region
    $region38: #{tpu_custom_call.1} parent=1 // pred_check
      _
    $region39: #{tpu_custom_call.1} parent=1 // pred_check_branch
      %83 = sbr.rel (0) target = $region41
    $region40: #{tpu_custom_call.1} parent=1 // pred_region
      _
    $region41: #{tpu_custom_call.1} parent=1 // pred_fallthru
      _
    // Predicated region
    $region42: #{tpu_custom_call.1} parent=1 // pred_check
      _
    $region43: #{tpu_custom_call.1} parent=1 // pred_check_branch
      %85 = sbr.rel (0) target = $region45
    $region44: #{tpu_custom_call.1} parent=1 // pred_region
      %86 = dma.done [#allocation3], 64
    $region45: #{tpu_custom_call.1} parent=1 // pred_fallthru
      _
    // Predicated region
    $region46: #{tpu_custom_call.1} parent=1 // pred_check
      _
    $region47: #{tpu_custom_call.1} parent=1 // pred_check_branch
      %88 = sbr.rel (0) target = $region49
    $region48: #{tpu_custom_call.1} parent=1 // pred_region
      %89 = dma.done [#allocation5], 768
    $region49: #{tpu_custom_call.1} parent=1 // pred_fallthru
      _
    // Predicated region
    $region50: #{tpu_custom_call.1} parent=1 // pred_check
      _
    $region51: #{tpu_custom_call.1} parent=1 // pred_check_branch
      %91 = sbr.rel (0) target = $region53
    $region52: #{tpu_custom_call.1} parent=1 // pred_region
      %92 = dma.done [#allocation5], 64
    $region53: #{tpu_custom_call.1} parent=1 // pred_fallthru
      _
    // Predicated region
    $region54: #{tpu_custom_call.1} parent=1 // pred_check
      _
    $region55: #{tpu_custom_call.1} parent=1 // pred_check_branch
      %94 = sbr.rel (0) target = $region57
    $region56: #{tpu_custom_call.1} parent=1 // pred_region
      %95 = dma.done [#allocation8], 4096
    $region57: #{tpu_custom_call.1} parent=1 // pred_fallthru
      _
    // Predicated region
    $region58: #{tpu_custom_call.1} parent=1 // pred_check
      _
    $region59: #{tpu_custom_call.1} parent=1 // pred_check_branch
      %97 = sbr.rel (0) target = $region61
    $region60: #{tpu_custom_call.1} parent=1 // pred_region
      %98 = dma.done [#allocation8], 4096
    $region61: #{tpu_custom_call.1} parent=1 // pred_fallthru
      _
    %v100 = vld [vmem:[#allocation2] sm:$0xf]
    %v101 = vld [vmem:[#allocation4] sm:$0xff]
    %v102 = vld [vmem:[#allocation4 + $0x8] sm:$0xff]
    %v103 = vld [vmem:[#allocation4 + $0x10] sm:$0xff]
    %v104 = vld [vmem:[#allocation4 + $0x18] sm:$0xff]
    %v105 = vld [vmem:[#allocation4 + $0x20] sm:$0xff]
    %v106 = vld [vmem:[#allocation4 + $0x28] sm:$0xff]
    %v107 = vld [vmem:[#allocation6] sm:$0xf]
    %v109 = vlaneseq
    %v110 = vshrl.u32 %v109, 7
    %v111 = vsub.s32 0, %v110
    %v112 = vrot.slane %v107, %v111
    %v113 = vlaneseq
    %v114 = vshrl.u32 %v113, 7
    %v115 = vsub.s32 1, %v114
    %v116 = vrot.slane %v107, %v115
    %v117 = vlaneseq
    %v118 = vshrl.u32 %v117, 7
    %v119 = vsub.s32 2, %v118
    %v120 = vrot.slane %v107, %v119
    %v121 = vlaneseq
    %v122 = vshrl.u32 %v121, 7
    %v123 = vsub.s32 3, %v122
    %v124 = vrot.slane %v107, %v123
    %v135 = vunpack.c.l.b16 %v101
    %v136 = vunpack.c.h.b16 %v101
    %v137 = vunpack.c.l.b16 %v102
    %v138 = vunpack.c.h.b16 %v102
    %v139 = vunpack.c.l.b16 %v103
    %v140 = vunpack.c.h.b16 %v103
    %v141 = vunpack.c.l.b16 %v104
    %v142 = vunpack.c.h.b16 %v104
    %v143 = vunpack.c.l.b16 %v105
    %v144 = vunpack.c.h.b16 %v105
    %v145 = vunpack.c.l.b16 %v106
    %v146 = vunpack.c.h.b16 %v106
    %v147 = vpack.c.b16 %v139, %v135
    %v148 = vpack.c.b16 %v140, %v136
    %v149 = vpack.c.b16 %v141, %v137
    %v150 = vpack.c.b16 %v142, %v138
    %v151 = vpack.c.b16 %v143, %v143
    %v152 = vpack.c.b16 %v144, %v144
    %v153 = vpack.c.b16 %v145, %v145
    %v154 = vpack.c.b16 %v146, %v146
    %vm159 = vcmask 195584
    %v161 = vsel %vm159, %v100, 0
    %vm163 = vcmask 1043456
    %v165 = vsel %vm163, %v151, 0
    %v168 = vsel %vm163, %v152, 0
    %v171 = vsel %vm163, %v153, 0
    %v174 = vsel %vm163, %v154, 0
    %176 = vmatprep.subr.bf16.mxu0 0
    %177 = vmatpush1.bf16.msra.mxu0 0
    %178 = vmatprep.subr.bf16.mxu0 0
    %179 = vmatpush1.bf16.msra.mxu0 0
    %180 = vmatprep.subr.bf16.mxu0 0
    %181 = vmatpush1.bf16.msra.mxu0 0
    %182 = vmatprep.subr.bf16.mxu0 0
    %183 = vmatpush1.bf16.msra.mxu0 0
    %184 = vmatprep.subr.bf16.mxu0 0
    %185 = vmatpush1.bf16.msra.mxu0 0
    %186 = vmatprep.subr.bf16.mxu0 0
    %187 = vmatpush1.bf16.msra.mxu0 0
    %188 = vmatprep.subr.bf16.mxu0 %v168
    %189 = vmatpush1.bf16.msra.mxu0 %v165
    %190 = vmatprep.subr.bf16.mxu0 %v148
    %191 = vmatpush1.bf16.msra.mxu0 %v147
    %192 = vmatprep.subr.bf16.mxu0 0
    %193 = vmatpush2.bf16.msra.mxu0 0
    %194 = vmatprep.subr.bf16.mxu0 0
    %195 = vmatpush2.bf16.msra.mxu0 0
    %196 = vmatprep.subr.bf16.mxu0 0
    %197 = vmatpush2.bf16.msra.mxu0 0
    %198 = vmatprep.subr.bf16.mxu0 0
    %199 = vmatpush2.bf16.msra.mxu0 0
    %200 = vmatprep.subr.bf16.mxu0 0
    %201 = vmatpush2.bf16.msra.mxu0 0
    %202 = vmatprep.subr.bf16.mxu0 0
    %203 = vmatpush2.bf16.msra.mxu0 0
    %204 = vmatprep.subr.bf16.mxu0 0
    %205 = vmatpush2.bf16.msra.mxu0 0
    %206 = vmatprep.subr.bf16.mxu0 0
    %207 = vmatpush2.bf16.msra.mxu0 0
    %208 = vmatprep.mubr.bf16.mxu0 0
    %209 = vmatmul.mubr.bf16.gmra.mxu0 %v161
    %v210 = vpop.f32.mrf.mxu0
    %v211 = vadd.f32 %v112, %v210
    %v212 = vpop.f32.mrf.mxu0
    %v213 = vadd.f32 %v116, %v212
    %v214 = vpop.f32.mrf.mxu0
    %v215 = vpop.f32.mrf.mxu0
    %216 = vdwg.mxu0
    %217 = vmatprep.subr.bf16.mxu0 0
    %218 = vmatpush1.bf16.msra.mxu0 0
    %219 = vmatprep.subr.bf16.mxu0 0
    %220 = vmatpush1.bf16.msra.mxu0 0
    %221 = vmatprep.subr.bf16.mxu0 0
    %222 = vmatpush1.bf16.msra.mxu0 0
    %223 = vmatprep.subr.bf16.mxu0 0
    %224 = vmatpush1.bf16.msra.mxu0 0
    %225 = vmatprep.subr.bf16.mxu0 0
    %226 = vmatpush1.bf16.msra.mxu0 0
    %227 = vmatprep.subr.bf16.mxu0 0
    %228 = vmatpush1.bf16.msra.mxu0 0
    %229 = vmatprep.subr.bf16.mxu0 %v174
    %230 = vmatpush1.bf16.msra.mxu0 %v171
    %231 = vmatprep.subr.bf16.mxu0 %v150
    %232 = vmatpush1.bf16.msra.mxu0 %v149
    %233 = vmatprep.subr.bf16.mxu0 0
    %234 = vmatpush2.bf16.msra.mxu0 0
    %235 = vmatprep.subr.bf16.mxu0 0
    %236 = vmatpush2.bf16.msra.mxu0 0
    %237 = vmatprep.subr.bf16.mxu0 0
    %238 = vmatpush2.bf16.msra.mxu0 0
    %239 = vmatprep.subr.bf16.mxu0 0
    %240 = vmatpush2.bf16.msra.mxu0 0
    %241 = vmatprep.subr.bf16.mxu0 0
    %242 = vmatpush2.bf16.msra.mxu0 0
    %243 = vmatprep.subr.bf16.mxu0 0
    %244 = vmatpush2.bf16.msra.mxu0 0
    %245 = vmatprep.subr.bf16.mxu0 0
    %246 = vmatpush2.bf16.msra.mxu0 0
    %247 = vmatprep.subr.bf16.mxu0 0
    %248 = vmatpush2.bf16.msra.mxu0 0
    %249 = vmatprep.mubr.bf16.mxu0 0
    %250 = vmatmul.mubr.bf16.gmra.mxu0 %v161
    %v251 = vpop.f32.mrf.mxu0
    %v252 = vadd.f32 %v120, %v251
    %v253 = vpop.f32.mrf.mxu0
    %v254 = vadd.f32 %v124, %v253
    %v255 = vpop.f32.mrf.mxu0
    %v256 = vpop.f32.mrf.mxu0
    %257 = vdwg.mxu0
    %v258 = vmax.f32 %v211, 0.0
    %v259 = vmax.f32 %v213, 0.0
    %v260 = vmax.f32 %v252, 0.0
    %v261 = vmax.f32 %v254, 0.0
    %v262 = vpack.c.bf16 %v258, %v258
    %v263 = vpack.c.bf16 %v259, %v259
    %v264 = vpack.c.bf16 %v260, %v260
    %v265 = vpack.c.bf16 %v261, %v261
    %v266 = vld [vmem:[#allocation7] sm:$0xff]
    %v267 = vld [vmem:[#allocation7 + $0x8] sm:$0xff]
    %v268 = vld [vmem:[#allocation7 + $0x10] sm:$0xff]
    %v269 = vld [vmem:[#allocation7 + $0x18] sm:$0xff]
    %v270 = vld [vmem:[#allocation7 + $0x20] sm:$0xff]
    %v271 = vld [vmem:[#allocation7 + $0x28] sm:$0xff]
    %v272 = vld [vmem:[#allocation7 + $0x30] sm:$0xff]
    %v273 = vld [vmem:[#allocation7 + $0x38] sm:$0xff]
    %v274 = vld [vmem:[#allocation7 + $0x40] sm:$0xff]
    %v275 = vld [vmem:[#allocation7 + $0x48] sm:$0xff]
    %v276 = vld [vmem:[#allocation7 + $0x50] sm:$0xff]
    %v277 = vld [vmem:[#allocation7 + $0x58] sm:$0xff]
    %v278 = vld [vmem:[#allocation7 + $0x60] sm:$0xff]
    %v279 = vld [vmem:[#allocation7 + $0x68] sm:$0xff]
    %v280 = vld [vmem:[#allocation7 + $0x70] sm:$0xff]
    %v281 = vld [vmem:[#allocation7 + $0x78] sm:$0xff]
    %v282 = vld [vmem:[#allocation7 + $0x80] sm:$0xff]
    %v283 = vld [vmem:[#allocation7 + $0x88] sm:$0xff]
    %v284 = vld [vmem:[#allocation7 + $0x90] sm:$0xff]
    %v285 = vld [vmem:[#allocation7 + $0x98] sm:$0xff]
    %v286 = vld [vmem:[#allocation7 + $0xa0] sm:$0xff]
    %v287 = vld [vmem:[#allocation7 + $0xa8] sm:$0xff]
    %v288 = vld [vmem:[#allocation7 + $0xb0] sm:$0xff]
    %v289 = vld [vmem:[#allocation7 + $0xb8] sm:$0xff]
    %v290 = vld [vmem:[#allocation7 + $0xc0] sm:$0xff]
    %v291 = vld [vmem:[#allocation7 + $0xc8] sm:$0xff]
    %v292 = vld [vmem:[#allocation7 + $0xd0] sm:$0xff]
    %v293 = vld [vmem:[#allocation7 + $0xd8] sm:$0xff]
    %v294 = vld [vmem:[#allocation7 + $0xe0] sm:$0xff]
    %v295 = vld [vmem:[#allocation7 + $0xe8] sm:$0xff]
    %v296 = vld [vmem:[#allocation7 + $0xf0] sm:$0xff]
    %v297 = vld [vmem:[#allocation7 + $0xf8] sm:$0xff]
    %v298 = vld [vmem:[%s4] sm:$0x3]
    %v300 = vlaneseq
    %v301 = vshrl.u32 %v300, 7
    %v302 = vsub.s32 0, %v301
    %v303 = vrot.slane %v298, %v302
    %v304 = vlaneseq
    %v305 = vshrl.u32 %v304, 7
    %v306 = vsub.s32 1, %v305
    %v307 = vrot.slane %v298, %v306
    %v342 = vunpack.c.l.b16 %v266
    %v343 = vunpack.c.h.b16 %v266
    %v344 = vunpack.c.l.b16 %v267
    %v345 = vunpack.c.h.b16 %v267
    %v346 = vunpack.c.l.b16 %v268
    %v347 = vunpack.c.h.b16 %v268
    %v348 = vunpack.c.l.b16 %v269
    %v349 = vunpack.c.h.b16 %v269
    %v350 = vunpack.c.l.b16 %v270
    %v351 = vunpack.c.h.b16 %v270
    %v352 = vunpack.c.l.b16 %v271
    %v353 = vunpack.c.h.b16 %v271
    %v354 = vunpack.c.l.b16 %v272
    %v355 = vunpack.c.h.b16 %v272
    %v356 = vunpack.c.l.b16 %v273
    %v357 = vunpack.c.h.b16 %v273
    %v358 = vunpack.c.l.b16 %v274
    %v359 = vunpack.c.h.b16 %v274
    %v360 = vunpack.c.l.b16 %v275
    %v361 = vunpack.c.h.b16 %v275
    %v362 = vunpack.c.l.b16 %v276
    %v363 = vunpack.c.h.b16 %v276
    %v364 = vunpack.c.l.b16 %v277
    %v365 = vunpack.c.h.b16 %v277
    %v366 = vunpack.c.l.b16 %v278
    %v367 = vunpack.c.h.b16 %v278
    %v368 = vunpack.c.l.b16 %v279
    %v369 = vunpack.c.h.b16 %v279
    %v370 = vunpack.c.l.b16 %v280
    %v371 = vunpack.c.h.b16 %v280
    %v372 = vunpack.c.l.b16 %v281
    %v373 = vunpack.c.h.b16 %v281
    %v374 = vunpack.c.l.b16 %v282
    %v375 = vunpack.c.h.b16 %v282
    %v376 = vunpack.c.l.b16 %v283
    %v377 = vunpack.c.h.b16 %v283
    %v378 = vunpack.c.l.b16 %v284
    %v379 = vunpack.c.h.b16 %v284
    %v380 = vunpack.c.l.b16 %v285
    %v381 = vunpack.c.h.b16 %v285
    %v382 = vunpack.c.l.b16 %v286
    %v383 = vunpack.c.h.b16 %v286
    %v384 = vunpack.c.l.b16 %v287
    %v385 = vunpack.c.h.b16 %v287
    %v386 = vunpack.c.l.b16 %v288
    %v387 = vunpack.c.h.b16 %v288
    %v388 = vunpack.c.l.b16 %v289
    %v389 = vunpack.c.h.b16 %v289
    %v390 = vunpack.c.l.b16 %v290
    %v391 = vunpack.c.h.b16 %v290
    %v392 = vunpack.c.l.b16 %v291
    %v393 = vunpack.c.h.b16 %v291
    %v394 = vunpack.c.l.b16 %v292
    %v395 = vunpack.c.h.b16 %v292
    %v396 = vunpack.c.l.b16 %v293
    %v397 = vunpack.c.h.b16 %v293
    %v398 = vunpack.c.l.b16 %v294
    %v399 = vunpack.c.h.b16 %v294
    %v400 = vunpack.c.l.b16 %v295
    %v401 = vunpack.c.h.b16 %v295
    %v402 = vunpack.c.l.b16 %v296
    %v403 = vunpack.c.h.b16 %v296
    %v404 = vunpack.c.l.b16 %v297
    %v405 = vunpack.c.h.b16 %v297
    %v406 = vpack.c.b16 %v344, %v342
    %v407 = vpack.c.b16 %v345, %v343
    %v408 = vpack.c.b16 %v348, %v346
    %v409 = vpack.c.b16 %v349, %v347
    %v410 = vpack.c.b16 %v352, %v350
    %v411 = vpack.c.b16 %v353, %v351
    %v412 = vpack.c.b16 %v356, %v354
    %v413 = vpack.c.b16 %v357, %v355
    %v414 = vpack.c.b16 %v360, %v358
    %v415 = vpack.c.b16 %v361, %v359
    %v416 = vpack.c.b16 %v364, %v362
    %v417 = vpack.c.b16 %v365, %v363
    %v418 = vpack.c.b16 %v368, %v366
    %v419 = vpack.c.b16 %v369, %v367
    %v420 = vpack.c.b16 %v372, %v370
    %v421 = vpack.c.b16 %v373, %v371
    %v422 = vpack.c.b16 %v376, %v374
    %v423 = vpack.c.b16 %v377, %v375
    %v424 = vpack.c.b16 %v380, %v378
    %v425 = vpack.c.b16 %v381, %v379
    %v426 = vpack.c.b16 %v384, %v382
    %v427 = vpack.c.b16 %v385, %v383
    %v428 = vpack.c.b16 %v388, %v386
    %v429 = vpack.c.b16 %v389, %v387
    %v430 = vpack.c.b16 %v392, %v390
    %v431 = vpack.c.b16 %v393, %v391
    %v432 = vpack.c.b16 %v396, %v394
    %v433 = vpack.c.b16 %v397, %v395
    %v434 = vpack.c.b16 %v400, %v398
    %v435 = vpack.c.b16 %v401, %v399
    %v436 = vpack.c.b16 %v404, %v402
    %v437 = vpack.c.b16 %v405, %v403
    %470 = vmatprep.subr.bf16.mxu0 %v421
    %471 = vmatpush1.bf16.msra.mxu0 %v420
    %472 = vmatprep.subr.bf16.mxu0 %v419
    %473 = vmatpush1.bf16.msra.mxu0 %v418
    %474 = vmatprep.subr.bf16.mxu0 %v417
    %475 = vmatpush1.bf16.msra.mxu0 %v416
    %476 = vmatprep.subr.bf16.mxu0 %v415
    %477 = vmatpush1.bf16.msra.mxu0 %v414
    %478 = vmatprep.subr.bf16.mxu0 %v413
    %479 = vmatpush1.bf16.msra.mxu0 %v412
    %480 = vmatprep.subr.bf16.mxu0 %v411
    %481 = vmatpush1.bf16.msra.mxu0 %v410
    %482 = vmatprep.subr.bf16.mxu0 %v409
    %483 = vmatpush1.bf16.msra.mxu0 %v408
    %484 = vmatprep.subr.bf16.mxu0 %v407
    %485 = vmatpush1.bf16.msra.mxu0 %v406
    %486 = vmatprep.subr.bf16.mxu0 %v437
    %487 = vmatpush2.bf16.msra.mxu0 %v436
    %488 = vmatprep.subr.bf16.mxu0 %v435
    %489 = vmatpush2.bf16.msra.mxu0 %v434
    %490 = vmatprep.subr.bf16.mxu0 %v433
    %491 = vmatpush2.bf16.msra.mxu0 %v432
    %492 = vmatprep.subr.bf16.mxu0 %v431
    %493 = vmatpush2.bf16.msra.mxu0 %v430
    %494 = vmatprep.subr.bf16.mxu0 %v429
    %495 = vmatpush2.bf16.msra.mxu0 %v428
    %496 = vmatprep.subr.bf16.mxu0 %v427
    %497 = vmatpush2.bf16.msra.mxu0 %v426
    %498 = vmatprep.subr.bf16.mxu0 %v425
    %499 = vmatpush2.bf16.msra.mxu0 %v424
    %500 = vmatprep.subr.bf16.mxu0 %v423
    %501 = vmatpush2.bf16.msra.mxu0 %v422
    %502 = vmatprep.mubr.bf16.mxu0 %v263
    %503 = vmatmul.mubr.bf16.gmra.mxu0 %v262
    %v504 = vpop.f32.mrf.mxu0
    %v505 = vadd.f32 %v303, %v504
    %v506 = vpop.f32.mrf.mxu0
    %v507 = vadd.f32 %v307, %v506
    %v508 = vpop.f32.mrf.mxu0
    %v509 = vpop.f32.mrf.mxu0
    %510 = vdwg.mxu0
    %v511 = vmax.f32 %v505, 0.0
    %v512 = vmax.f32 %v507, 0.0
    %v513 = vld [vmem:[#allocation9] sm:$0xff]
    %v514 = vld [vmem:[#allocation9 + $0x8] sm:$0xff]
    %v515 = vld [vmem:[#allocation9 + $0x10] sm:$0xff]
    %v516 = vld [vmem:[#allocation9 + $0x18] sm:$0xff]
    %v517 = vld [vmem:[#allocation9 + $0x20] sm:$0xff]
    %v518 = vld [vmem:[#allocation9 + $0x28] sm:$0xff]
    %v519 = vld [vmem:[#allocation9 + $0x30] sm:$0xff]
    %v520 = vld [vmem:[#allocation9 + $0x38] sm:$0xff]
    %v521 = vld [vmem:[#allocation9 + $0x40] sm:$0xff]
    %v522 = vld [vmem:[#allocation9 + $0x48] sm:$0xff]
    %v523 = vld [vmem:[#allocation9 + $0x50] sm:$0xff]
    %v524 = vld [vmem:[#allocation9 + $0x58] sm:$0xff]
    %v525 = vld [vmem:[#allocation9 + $0x60] sm:$0xff]
    %v526 = vld [vmem:[#allocation9 + $0x68] sm:$0xff]
    %v527 = vld [vmem:[#allocation9 + $0x70] sm:$0xff]
    %v528 = vld [vmem:[#allocation9 + $0x78] sm:$0xff]
    %v529 = vld [vmem:[#allocation9 + $0x80] sm:$0xff]
    %v530 = vld [vmem:[#allocation9 + $0x88] sm:$0xff]
    %v531 = vld [vmem:[#allocation9 + $0x90] sm:$0xff]
    %v532 = vld [vmem:[#allocation9 + $0x98] sm:$0xff]
    %v533 = vld [vmem:[#allocation9 + $0xa0] sm:$0xff]
    %v534 = vld [vmem:[#allocation9 + $0xa8] sm:$0xff]
    %v535 = vld [vmem:[#allocation9 + $0xb0] sm:$0xff]
    %v536 = vld [vmem:[#allocation9 + $0xb8] sm:$0xff]
    %v537 = vld [vmem:[#allocation9 + $0xc0] sm:$0xff]
    %v538 = vld [vmem:[#allocation9 + $0xc8] sm:$0xff]
    %v539 = vld [vmem:[#allocation9 + $0xd0] sm:$0xff]
    %v540 = vld [vmem:[#allocation9 + $0xd8] sm:$0xff]
    %v541 = vld [vmem:[#allocation9 + $0xe0] sm:$0xff]
    %v542 = vld [vmem:[#allocation9 + $0xe8] sm:$0xff]
    %v543 = vld [vmem:[#allocation9 + $0xf0] sm:$0xff]
    %v544 = vld [vmem:[#allocation9 + $0xf8] sm:$0xff]
    %v545 = vld [vmem:[%s6] sm:$0x3]
    %v547 = vlaneseq
    %v548 = vshrl.u32 %v547, 7
    %v549 = vsub.s32 0, %v548
    %v550 = vrot.slane %v545, %v549
    %v551 = vlaneseq
    %v552 = vshrl.u32 %v551, 7
    %v553 = vsub.s32 1, %v552
    %v554 = vrot.slane %v545, %v553
    %v589 = vunpack.c.l.b16 %v513
    %v590 = vunpack.c.h.b16 %v513
    %v591 = vunpack.c.l.b16 %v514
    %v592 = vunpack.c.h.b16 %v514
    %v593 = vunpack.c.l.b16 %v515
    %v594 = vunpack.c.h.b16 %v515
    %v595 = vunpack.c.l.b16 %v516
    %v596 = vunpack.c.h.b16 %v516
    %v597 = vunpack.c.l.b16 %v517
    %v598 = vunpack.c.h.b16 %v517
    %v599 = vunpack.c.l.b16 %v518
    %v600 = vunpack.c.h.b16 %v518
    %v601 = vunpack.c.l.b16 %v519
    %v602 = vunpack.c.h.b16 %v519
    %v603 = vunpack.c.l.b16 %v520
    %v604 = vunpack.c.h.b16 %v520
    %v605 = vunpack.c.l.b16 %v521
    %v606 = vunpack.c.h.b16 %v521
    %v607 = vunpack.c.l.b16 %v522
    %v608 = vunpack.c.h.b16 %v522
    %v609 = vunpack.c.l.b16 %v523
    %v610 = vunpack.c.h.b16 %v523
    %v611 = vunpack.c.l.b16 %v524
    %v612 = vunpack.c.h.b16 %v524
    %v613 = vunpack.c.l.b16 %v525
    %v614 = vunpack.c.h.b16 %v525
    %v615 = vunpack.c.l.b16 %v526
    %v616 = vunpack.c.h.b16 %v526
    %v617 = vunpack.c.l.b16 %v527
    %v618 = vunpack.c.h.b16 %v527
    %v619 = vunpack.c.l.b16 %v528
    %v620 = vunpack.c.h.b16 %v528
    %v621 = vunpack.c.l.b16 %v529
    %v622 = vunpack.c.h.b16 %v529
    %v623 = vunpack.c.l.b16 %v530
    %v624 = vunpack.c.h.b16 %v530
    %v625 = vunpack.c.l.b16 %v531
    %v626 = vunpack.c.h.b16 %v531
    %v627 = vunpack.c.l.b16 %v532
    %v628 = vunpack.c.h.b16 %v532
    %v629 = vunpack.c.l.b16 %v533
    %v630 = vunpack.c.h.b16 %v533
    %v631 = vunpack.c.l.b16 %v534
    %v632 = vunpack.c.h.b16 %v534
    %v633 = vunpack.c.l.b16 %v535
    %v634 = vunpack.c.h.b16 %v535
    %v635 = vunpack.c.l.b16 %v536
    %v636 = vunpack.c.h.b16 %v536
    %v637 = vunpack.c.l.b16 %v537
    %v638 = vunpack.c.h.b16 %v537
    %v639 = vunpack.c.l.b16 %v538
    %v640 = vunpack.c.h.b16 %v538
    %v641 = vunpack.c.l.b16 %v539
    %v642 = vunpack.c.h.b16 %v539
    %v643 = vunpack.c.l.b16 %v540
    %v644 = vunpack.c.h.b16 %v540
    %v645 = vunpack.c.l.b16 %v541
    %v646 = vunpack.c.h.b16 %v541
    %v647 = vunpack.c.l.b16 %v542
    %v648 = vunpack.c.h.b16 %v542
    %v649 = vunpack.c.l.b16 %v543
    %v650 = vunpack.c.h.b16 %v543
    %v651 = vunpack.c.l.b16 %v544
    %v652 = vunpack.c.h.b16 %v544
    %v653 = vpack.c.b16 %v591, %v589
    %v654 = vpack.c.b16 %v592, %v590
    %v655 = vpack.c.b16 %v595, %v593
    %v656 = vpack.c.b16 %v596, %v594
    %v657 = vpack.c.b16 %v599, %v597
    %v658 = vpack.c.b16 %v600, %v598
    %v659 = vpack.c.b16 %v603, %v601
    %v660 = vpack.c.b16 %v604, %v602
    %v661 = vpack.c.b16 %v607, %v605
    %v662 = vpack.c.b16 %v608, %v606
    %v663 = vpack.c.b16 %v611, %v609
    %v664 = vpack.c.b16 %v612, %v610
    %v665 = vpack.c.b16 %v615, %v613
    %v666 = vpack.c.b16 %v616, %v614
    %v667 = vpack.c.b16 %v619, %v617
    %v668 = vpack.c.b16 %v620, %v618
    %v669 = vpack.c.b16 %v623, %v621
    %v670 = vpack.c.b16 %v624, %v622
    %v671 = vpack.c.b16 %v627, %v625
    %v672 = vpack.c.b16 %v628, %v626
    %v673 = vpack.c.b16 %v631, %v629
    %v674 = vpack.c.b16 %v632, %v630
    %v675 = vpack.c.b16 %v635, %v633
    %v676 = vpack.c.b16 %v636, %v634
    %v677 = vpack.c.b16 %v639, %v637
    %v678 = vpack.c.b16 %v640, %v638
    %v679 = vpack.c.b16 %v643, %v641
    %v680 = vpack.c.b16 %v644, %v642
    %v681 = vpack.c.b16 %v647, %v645
    %v682 = vpack.c.b16 %v648, %v646
    %v683 = vpack.c.b16 %v651, %v649
    %v684 = vpack.c.b16 %v652, %v650
    %717 = vmatprep.subr.bf16.mxu0 %v668
    %718 = vmatpush1.bf16.msra.mxu0 %v667
    %719 = vmatprep.subr.bf16.mxu0 %v666
    %720 = vmatpush1.bf16.msra.mxu0 %v665
    %721 = vmatprep.subr.bf16.mxu0 %v664
    %722 = vmatpush1.bf16.msra.mxu0 %v663
    %723 = vmatprep.subr.bf16.mxu0 %v662
    %724 = vmatpush1.bf16.msra.mxu0 %v661
    %725 = vmatprep.subr.bf16.mxu0 %v660
    %726 = vmatpush1.bf16.msra.mxu0 %v659
    %727 = vmatprep.subr.bf16.mxu0 %v658
    %728 = vmatpush1.bf16.msra.mxu0 %v657
    %729 = vmatprep.subr.bf16.mxu0 %v656
    %730 = vmatpush1.bf16.msra.mxu0 %v655
    %731 = vmatprep.subr.bf16.mxu0 %v654
    %732 = vmatpush1.bf16.msra.mxu0 %v653
    %733 = vmatprep.subr.bf16.mxu0 %v684
    %734 = vmatpush2.bf16.msra.mxu0 %v683
    %735 = vmatprep.subr.bf16.mxu0 %v682
    %736 = vmatpush2.bf16.msra.mxu0 %v681
    %737 = vmatprep.subr.bf16.mxu0 %v680
    %738 = vmatpush2.bf16.msra.mxu0 %v679
    %739 = vmatprep.subr.bf16.mxu0 %v678
    %740 = vmatpush2.bf16.msra.mxu0 %v677
    %741 = vmatprep.subr.bf16.mxu0 %v676
    %742 = vmatpush2.bf16.msra.mxu0 %v675
    %743 = vmatprep.subr.bf16.mxu0 %v674
    %744 = vmatpush2.bf16.msra.mxu0 %v673
    %745 = vmatprep.subr.bf16.mxu0 %v672
    %746 = vmatpush2.bf16.msra.mxu0 %v671
    %747 = vmatprep.subr.bf16.mxu0 %v670
    %748 = vmatpush2.bf16.msra.mxu0 %v669
    %749 = vmatprep.mubr.bf16.mxu0 %v265
    %750 = vmatmul.mubr.bf16.gmra.mxu0 %v264
    %v751 = vpop.f32.mrf.mxu0
    %v752 = vadd.f32 %v550, %v751
    %v753 = vpop.f32.mrf.mxu0
    %v754 = vadd.f32 %v554, %v753
    %v755 = vpop.f32.mrf.mxu0
    %v756 = vpop.f32.mrf.mxu0
    %757 = vdwg.mxu0
    %v758 = vmax.f32 %v752, 0.0
    %v759 = vmax.f32 %v754, 0.0
    %v760 = vld [vmem:[%s7] sm:$0x3]
    %v762 = vlaneseq
    %v763 = vshrl.u32 %v762, 7
    %v764 = vsub.s32 0, %v763
    %v765 = vrot.slane %v760, %v764
    %v766 = vlaneseq
    %v767 = vshrl.u32 %v766, 7
    %v768 = vsub.s32 1, %v767
    %v769 = vrot.slane %v760, %v768
    %v772 = vmul.f32 %v511, %v765
    %v773 = vmul.f32 %v512, %v769
    %v774 = vadd.f32 %v772, %v773
    %775 = vadd.xlane.f32.xlu0 %v774
    %v776 = vpop.xlane.xlu0 %775
    %v777 = vld [vmem:[%s8] sm:$0x3]
    %v779 = vlaneseq
    %v780 = vshrl.u32 %v779, 7
    %v781 = vsub.s32 0, %v780
    %v782 = vrot.slane %v777, %v781
    %v783 = vlaneseq
    %v784 = vshrl.u32 %v783, 7
    %v785 = vsub.s32 1, %v784
    %v786 = vrot.slane %v777, %v785
    %v789 = vmul.f32 %v758, %v782
    %v790 = vmul.f32 %v759, %v786
    %v791 = vadd.f32 %v789, %v790
    %792 = vadd.xlane.f32.xlu0 %v791
    %v793 = vpop.xlane.xlu0 %792
    %vm794 = vcmask 7168
    %v795 = vsel %vm794, %v776, %v793
    %v796 = vld [vmem:[%s9] sm:$0x1]
    %v798 = vlaneseq
    %v799 = vshrl.u32 %v798, 7
    %v800 = vsub.s32 0, %v799
    %v801 = vrot.slane %v796, %v800
    %v803 = vadd.f32 %v795, %v801
    %vm804 = vcmask 15360
    %805 = vst.msk [vmem:[%s10] sm:$0xff] %vm804, %v803
    // Predicated region
    $region62: #{tpu_custom_call.1} parent=1 // pred_check
      _
    $region63: #{tpu_custom_call.1} parent=1 // pred_check_branch
      %807 = sbr.rel (0) target = $region65
    $region64: #{tpu_custom_call.1} parent=1 // pred_region
      _
    $region65: #{tpu_custom_call.1} parent=1 // pred_fallthru
      _
    // Predicated region
    $region66: #{tpu_custom_call.1} parent=1 // pred_check
      _
    $region67: #{tpu_custom_call.1} parent=1 // pred_check_branch
      %809 = sbr.rel (0) target = $region69
    $region68: #{tpu_custom_call.1} parent=1 // pred_region
      _
    $region69: #{tpu_custom_call.1} parent=1 // pred_fallthru
      _
    %810 = vsyncpa [#allocation3], 1
    %811 = vsyncpa [#allocation5], 1
    %812 = vsyncpa [#allocation8], 1

</llo_original>
